<compile_context>
chip_gen: v5e
topology: v5e:2x2
jax: 0.10.0
libtpu: 0.0.40
codegen_flags: <defaults>
</compile_context>

<pallas_src>
import jax
import jax.numpy as jnp
from jax.experimental import pallas as pl
from jax.experimental.pallas import tpu as pltpu

# "engine" dimensions (small, consistent with an NCHW image input)
N, CIN, H, W = 2, 4, 16, 16     # batch, in-channels, spatial
COUT = 32                       # conv output channels
NCLS = 16                       # classifier width (engine output binding)
KH = KW = 3                     # conv kernel

HW = H * W                      # 256
NHW = N * HW                    # 512 rows of the im2col matrix
KIM = KH * KW * CIN             # 36  im2col contraction dim
KPAD = 128                      # lane-dense contraction dim (zero padded)
CPAD = 128                      # lane-dense conv-channel dim (zero padded)
NPAD = 128                      # lane-dense classifier width (zero padded)


def _engine_kernel(p_ref, wc_ref, bc_ref, pool_ref, wfc_ref, bfc_ref, o_ref):
    """Single-invocation engine body: one im2col matmul + fused epilogue.

    p_ref   : (NHW, KPAD)  bf16  im2col patches (zero-padded K, lane-dense)
    wc_ref  : (KPAD, CPAD) bf16  conv weights flattened (dy, dx, ci) order,
                                  channels zero-padded to 128
    bc_ref  : (1, CPAD)    f32   conv bias (zero-padded)
    pool_ref: (N, NHW)     f32   per-batch mean-pool matrix (1/HW blocks)
    wfc_ref : (CPAD, NPAD) f32   classifier weights (zero-padded rows & cols)
    bfc_ref : (1, NPAD)    f32   classifier bias (zero-padded)
    o_ref   : (N, NPAD)    f32   logits (padded; wrapper slices [:, :NCLS])
    """
    # conv3x3 as ONE MXU matmul: bf16 operands, f32 accumulation.
    acc = jnp.dot(p_ref[...], wc_ref[...],
                  preferred_element_type=jnp.float32)          # (NHW, CPAD) f32
    # bias + ReLU on the VPU in f32, fully lane-dense (unmasked vregs).
    acc = jnp.maximum(acc + bc_ref[...], 0.0)
    # global average pool as an MXU matmul (keeps the XLU out of the picture).
    pooled = jnp.dot(pool_ref[...], acc,
                     preferred_element_type=jnp.float32)       # (N, CPAD)
    # classifier + bias; padded rows/cols of wfc/bfc are zero -> extra cols 0.
    logits = jnp.dot(pooled, wfc_ref[...],
                     preferred_element_type=jnp.float32) + bfc_ref[...]
    o_ref[...] = logits.astype(o_ref.dtype)                    # unmasked 128-lane store


def trt_module_forward(x_nchw, params):
    """Mirrors TRTModule.forward(*inputs): takes the NCHW input tensor,
    runs the (synthetic) engine, returns outputs[0] of shape (batch, NCLS)."""
    wconv, bconv, wfc, bfc = params

    # ---- wrapper-side layout plumbing (XLA, runs once in HBM) -------------
    x = jnp.transpose(x_nchw, (0, 2, 3, 1))                    # NCHW -> NHWC
    xp = jnp.pad(x, ((0, 0), (1, 1), (1, 1), (0, 0)))          # SAME pad for 3x3
    # im2col: 9 shifted views stacked on a tap axis -> (N, H, W, 9, CIN)
    taps = [xp[:, dy:dy + H, dx:dx + W, :]
            for dy in range(KH) for dx in range(KW)]
    patches = jnp.stack(taps, axis=3).reshape(NHW, KIM)        # (512, 36)
    patches = jnp.pad(patches, ((0, 0), (0, KPAD - KIM)))      # lane-dense K
    patches = patches.astype(jnp.bfloat16)                     # MXU operand

    wc = jnp.pad(wconv.reshape(KIM, COUT),
                 ((0, KPAD - KIM), (0, CPAD - COUT)))          # (128, 128)
    wc = wc.astype(jnp.bfloat16)                               # MXU operand
    bc = jnp.pad(bconv, ((0, 0), (0, CPAD - COUT)))            # (1, 128)

    # mean-pool matrix: row n selects the HW rows of batch n, scaled by 1/HW
    pool = jnp.repeat(jnp.eye(N, dtype=jnp.float32), HW, axis=1) / float(HW)

    wfc_p = jnp.pad(wfc, ((0, CPAD - COUT), (0, NPAD - NCLS))) # (128, 128)
    bfc_p = jnp.pad(bfc, ((0, 0), (0, NPAD - NCLS)))           # (1, 128)

    # ---- single Pallas invocation: whole arrays resident in VMEM ----------
    vmem = lambda: pl.BlockSpec(memory_space=pltpu.MemorySpace.VMEM)
    out = pl.pallas_call(
        _engine_kernel,
        out_shape=jax.ShapeDtypeStruct((N, NPAD), jnp.float32),
        in_specs=[vmem(), vmem(), vmem(), vmem(), vmem(), vmem()],
        out_specs=vmem(),
    )(patches, wc, bc, pool, wfc_p, bfc_p)
    return out[:, :NCLS]


def _reference(x_nchw, params):
    """Pure-JAX f32 reference of the synthetic engine (silent sanity check)."""
    wconv, bconv, wfc, bfc = params
    x = jnp.transpose(x_nchw, (0, 2, 3, 1))
    y = jax.lax.conv_general_dilated(
        x, wconv, window_strides=(1, 1), padding="SAME",
        dimension_numbers=("NHWC", "HWIO", "NHWC"))
    y = jnp.maximum(y + bconv[0], 0.0)
    pooled = jnp.mean(y, axis=(1, 2))                          # (N, COUT)
    return pooled @ wfc + bfc[0]


def _make_params():
    key = jax.random.PRNGKey(42)
    k1, k2, k3, k4 = jax.random.split(key, 4)
    wconv = jax.random.normal(k1, (KH, KW, CIN, COUT), jnp.float32) * 0.1
    bconv = jax.random.normal(k2, (1, COUT), jnp.float32) * 0.1
    wfc = jax.random.normal(k3, (COUT, NCLS), jnp.float32) * 0.1
    bfc = jax.random.normal(k4, (1, NCLS), jnp.float32) * 0.1
    return wconv, bconv, wfc, bfc


if __name__ == "__main__":
    params = _make_params()
    x = jax.random.normal(jax.random.PRNGKey(0), (N, CIN, H, W), jnp.float32)

    out = trt_module_forward(x, params)
    out = jax.block_until_ready(out)

    ref = _reference(x, params)
    assert out.shape == (N, NCLS)
    # bf16 MXU operands (f32 accumulation) -> relaxed tolerance vs f32 reference
    assert jnp.allclose(out, ref, atol=2e-2, rtol=2e-2), \
        float(jnp.max(jnp.abs(out - ref)))
    print("KERNEL_OK")
</pallas_src>

<mosaic_0001>
module attributes {stable_mosaic.version = 11 : i64} {
  func.func @_engine_kernel(%arg0: memref<512x128xbf16, #tpu.memory_space<vmem>>, %arg1: memref<128x128xbf16, #tpu.memory_space<vmem>>, %arg2: memref<1x128xf32, #tpu.memory_space<vmem>>, %arg3: memref<2x512xf32, #tpu.memory_space<vmem>>, %arg4: memref<128x128xf32, #tpu.memory_space<vmem>>, %arg5: memref<1x128xf32, #tpu.memory_space<vmem>>, %arg6: memref<2x128xf32, #tpu.memory_space<vmem>>) attributes {dimension_semantics = [], scalar_prefetch = 0 : i64, scratch_operands = 0 : i64, tpu.core_type = #tpu.core_type<tc>} {
    %c0 = arith.constant 0 : index
    %c0_0 = arith.constant 0 : index
    %0 = vector.load %arg0[%c0, %c0_0] : memref<512x128xbf16, #tpu.memory_space<vmem>>, vector<512x128xbf16>
    %c0_1 = arith.constant 0 : index
    %c0_2 = arith.constant 0 : index
    %1 = vector.load %arg1[%c0_1, %c0_2] : memref<128x128xbf16, #tpu.memory_space<vmem>>, vector<128x128xbf16>
    %cst = arith.constant dense<0.000000e+00> : vector<512x128xf32>
    %2 = tpu.matmul %0, %1, %cst {dimension_numbers = #tpu.dot_dimension_numbers<[1], [0], [0], [1], [0, 0, 1, 1], [], []>} : vector<512x128xbf16>, vector<128x128xbf16>, vector<512x128xf32> -> vector<512x128xf32>
    %c0_3 = arith.constant 0 : index
    %c0_4 = arith.constant 0 : index
    %3 = vector.load %arg2[%c0_3, %c0_4] : memref<1x128xf32, #tpu.memory_space<vmem>>, vector<1x128xf32>
    %4 = vector.broadcast %3 : vector<1x128xf32> to vector<512x128xf32>
    %5 = arith.addf %2, %4 : vector<512x128xf32>
    %cst_5 = arith.constant 0.000000e+00 : f32
    %6 = vector.broadcast %cst_5 : f32 to vector<512x128xf32>
    %7 = arith.maximumf %5, %6 : vector<512x128xf32>
    %c0_6 = arith.constant 0 : index
    %c0_7 = arith.constant 0 : index
    %8 = vector.load %arg3[%c0_6, %c0_7] : memref<2x512xf32, #tpu.memory_space<vmem>>, vector<2x512xf32>
    %cst_8 = arith.constant dense<0.000000e+00> : vector<2x128xf32>
    %9 = tpu.matmul %8, %7, %cst_8 {dimension_numbers = #tpu.dot_dimension_numbers<[1], [0], [0], [1], [0, 0, 1, 1], [], []>} : vector<2x512xf32>, vector<512x128xf32>, vector<2x128xf32> -> vector<2x128xf32>
    %c0_9 = arith.constant 0 : index
    %c0_10 = arith.constant 0 : index
    %10 = vector.load %arg4[%c0_9, %c0_10] : memref<128x128xf32, #tpu.memory_space<vmem>>, vector<128x128xf32>
    %cst_11 = arith.constant dense<0.000000e+00> : vector<2x128xf32>
    %11 = tpu.matmul %9, %10, %cst_11 {dimension_numbers = #tpu.dot_dimension_numbers<[1], [0], [0], [1], [0, 0, 1, 1], [], []>} : vector<2x128xf32>, vector<128x128xf32>, vector<2x128xf32> -> vector<2x128xf32>
    %c0_12 = arith.constant 0 : index
    %c0_13 = arith.constant 0 : index
    %12 = vector.load %arg5[%c0_12, %c0_13] : memref<1x128xf32, #tpu.memory_space<vmem>>, vector<1x128xf32>
    %13 = vector.broadcast %12 : vector<1x128xf32> to vector<2x128xf32>
    %14 = arith.addf %11, %13 : vector<2x128xf32>
    %c0_14 = arith.constant 0 : index
    %c0_15 = arith.constant 0 : index
    %15 = vector.load %arg6[%c0_14, %c0_15] : memref<2x128xf32, #tpu.memory_space<vmem>>, vector<2x128xf32>
    tpu.vector_store %arg6[%c0_14, %c0_15], %14 {strides = array<i32>} : memref<2x128xf32, #tpu.memory_space<vmem>>, vector<2x128xf32>,
    return
  }
}

</mosaic_0001>

<llo_original>
// kernel: tpu_custom_call.1
$region0: #{tpu_custom_call.1}
  #allocation0 [shape = 'u32[]', space=smem, size = 0x4, offset = 0x4, fixed_abs, tag = 'smem constant byte address 0x4 - core index']
  #allocation1 [shape = 'u32[72,128]{1,0:T(1,128)}', space=vmem, size = 0x9000, scoped, tag = 'internal scratch']
  %s0 = inlined_call_operand.hbm [shape: bf16[512,128], index: 0, kind: input, shape index: {}]
  %s1 = inlined_call_operand.hbm [shape: bf16[128,128], index: 1, kind: input, shape index: {}]
  %s2 = inlined_call_operand.vmem [shape: f32[1,128], index: 2, kind: input, shape index: {}]
  %s3 = inlined_call_operand.hbm [shape: f32[2,512], index: 3, kind: input, shape index: {}]
  %s4 = inlined_call_operand.hbm [shape: f32[128,128], index: 4, kind: input, shape index: {}]
  %s5 = inlined_call_operand.vmem [shape: f32[1,128], index: 5, kind: input, shape index: {}]
  %s6 = inlined_call_operand.hbm [shape: f32[2,128], index: 6, kind: output, shape index: {}]
  %s7 = sld [smem:[#allocation0]]
  $region50: #{tpu_custom_call.1} parent=0
    _
  %s9 = ssub.s32 1, %s7
  %s10 = scalar_select 0, %s9, %s7
  $region1: #{tpu_custom_call.1} parent=0
    #allocation2 [shape = 'u8[131072]{0}', space=vmem, size = 0x20000, scoped, tag = 'input window, operand 0, single buffered']
    #allocation3 [shape = 's32[1]{0}', space=sflag, size = 0x4, scoped, tag = 'scoped memory for tpu_custom_call.1']
    #allocation4 [shape = 's32[1]{0}', space=sflag, size = 0x4, scoped, tag = 'scoped memory for tpu_custom_call.1']
    #allocation5 [shape = 'u8[32768]{0}', space=vmem, size = 0x8000, scoped, tag = 'input window, operand 1, single buffered']
    #allocation6 [shape = 's32[1]{0}', space=sflag, size = 0x4, scoped, tag = 'scoped memory for tpu_custom_call.1']
    #allocation7 [shape = 'u8[4096]{0}', space=vmem, size = 0x1000, scoped, tag = 'input window, operand 3, single buffered']
    #allocation8 [shape = 'u8[65536]{0}', space=vmem, size = 0x10000, scoped, tag = 'input window, operand 4, single buffered']
    #allocation9 [shape = 's32[1]{0}', space=sflag, size = 0x4, scoped, tag = 'scoped memory for tpu_custom_call.1']
    #allocation10 [shape = 'u8[1024]{0}', space=vmem, size = 0x400, scoped, tag = 'output window, operand 0, single buffered']
    %11 = vsyncpa [#allocation3], 0
    %12 = vsyncpa [#allocation6], 0
    %13 = vsyncpa [#allocation9], 0
    %14 = vsyncpa [#allocation4], 0
    // Predicated region
    $region2: #{tpu_custom_call.1} parent=1 // pred_check
      _
    $region3: #{tpu_custom_call.1} parent=1 // pred_check_branch
      %16 = sbr.rel (0) target = $region5
    $region4: #{tpu_custom_call.1} parent=1 // pred_region
      %18 = vsyncadd [#allocation3], 0
      %s19 = sshll.u32 %s0, 4
      %s20 = int_to_ptr.hbm [resolvable:$true] %s19
      %s21 = sshll.u32 [#allocation2], 4
      %s22 = int_to_ptr.vmem [resolvable:$true] %s21
      %27 = dma.hbm_to_vmem [thread:$0]  %s20, 4096, %s22, [#allocation3], 64, 64, 4
    $region5: #{tpu_custom_call.1} parent=1 // pred_fallthru
      _
    // Predicated region
    $region6: #{tpu_custom_call.1} parent=1 // pred_check
      _
    $region7: #{tpu_custom_call.1} parent=1 // pred_check_branch
      %29 = sbr.rel (0) target = $region9
    $region8: #{tpu_custom_call.1} parent=1 // pred_region
      %31 = vsyncadd [#allocation6], 0
      %s32 = sshll.u32 %s1, 4
      %s33 = int_to_ptr.hbm [resolvable:$true] %s32
      %s34 = sshll.u32 [#allocation5], 4
      %s35 = int_to_ptr.vmem [resolvable:$true] %s34
      %40 = dma.hbm_to_vmem [thread:$0]  %s33, 1024, %s35, [#allocation6], 64, 64, 4
    $region9: #{tpu_custom_call.1} parent=1 // pred_fallthru
      _
    // Predicated region
    $region10: #{tpu_custom_call.1} parent=1 // pred_check
      _
    $region11: #{tpu_custom_call.1} parent=1 // pred_check_branch
      %42 = sbr.rel (0) target = $region13
    $region12: #{tpu_custom_call.1} parent=1 // pred_region
      _
    $region13: #{tpu_custom_call.1} parent=1 // pred_fallthru
      _
    // Predicated region
    $region14: #{tpu_custom_call.1} parent=1 // pred_check
      _
    $region15: #{tpu_custom_call.1} parent=1 // pred_check_branch
      %44 = sbr.rel (0) target = $region17
    $region16: #{tpu_custom_call.1} parent=1 // pred_region
      %46 = vsyncadd [#allocation6], 0
      %s48 = sshll.u32 %s3, 4
      %s49 = int_to_ptr.hbm [resolvable:$true] %s48
      %s50 = sshll.u32 [#allocation7], 4
      %s51 = int_to_ptr.vmem [resolvable:$true] %s50
      %53 = dma.hbm_to_vmem [thread:$0]  %s49, 128, %s51, [#allocation6]
    $region17: #{tpu_custom_call.1} parent=1 // pred_fallthru
      _
    // Predicated region
    $region18: #{tpu_custom_call.1} parent=1 // pred_check
      _
    $region19: #{tpu_custom_call.1} parent=1 // pred_check_branch
      %55 = sbr.rel (0) target = $region21
    $region20: #{tpu_custom_call.1} parent=1 // pred_region
      %57 = vsyncadd [#allocation9], 0
      %s58 = sshll.u32 %s4, 4
      %s59 = int_to_ptr.hbm [resolvable:$true] %s58
      %s60 = sshll.u32 [#allocation8], 4
      %s61 = int_to_ptr.vmem [resolvable:$true] %s60
      %66 = dma.hbm_to_vmem [thread:$0]  %s59, 2048, %s61, [#allocation9], 128, 128, 8
    $region21: #{tpu_custom_call.1} parent=1 // pred_fallthru
      _
    // Predicated region
    $region22: #{tpu_custom_call.1} parent=1 // pred_check
      _
    $region23: #{tpu_custom_call.1} parent=1 // pred_check_branch
      %68 = sbr.rel (0) target = $region25
    $region24: #{tpu_custom_call.1} parent=1 // pred_region
      _
    $region25: #{tpu_custom_call.1} parent=1 // pred_fallthru
      _
    // Predicated region
    $region26: #{tpu_custom_call.1} parent=1 // pred_check
      _
    $region27: #{tpu_custom_call.1} parent=1 // pred_check_branch
      %70 = sbr.rel (0) target = $region29
    $region28: #{tpu_custom_call.1} parent=1 // pred_region
      %72 = dma.done [#allocation3], 4096
    $region29: #{tpu_custom_call.1} parent=1 // pred_fallthru
      _
    // Predicated region
    $region30: #{tpu_custom_call.1} parent=1 // pred_check
      _
    $region31: #{tpu_custom_call.1} parent=1 // pred_check_branch
      %74 = sbr.rel (0) target = $region33
    $region32: #{tpu_custom_call.1} parent=1 // pred_region
      %76 = dma.done [#allocation6], 1024
    $region33: #{tpu_custom_call.1} parent=1 // pred_fallthru
      _
    // Predicated region
    $region34: #{tpu_custom_call.1} parent=1 // pred_check
      _
    $region35: #{tpu_custom_call.1} parent=1 // pred_check_branch
      %78 = sbr.rel (0) target = $region37
    $region36: #{tpu_custom_call.1} parent=1 // pred_region
      %80 = dma.done [#allocation6], 128
    $region37: #{tpu_custom_call.1} parent=1 // pred_fallthru
      _
    // Predicated region
    $region38: #{tpu_custom_call.1} parent=1 // pred_check
      _
    $region39: #{tpu_custom_call.1} parent=1 // pred_check_branch
      %82 = sbr.rel (0) target = $region41
    $region40: #{tpu_custom_call.1} parent=1 // pred_region
      %84 = dma.done [#allocation9], 2048
    $region41: #{tpu_custom_call.1} parent=1 // pred_fallthru
      _
    %v85 = vld [vmem:[#allocation2] sm:$0xf]
    %v86 = vld [vmem:[#allocation2 + $0x4] sm:$0xf]
    %v87 = vld [vmem:[#allocation2 + $0x8] sm:$0xf]
    %v88 = vld [vmem:[#allocation2 + $0xc] sm:$0xf]
    %v89 = vld [vmem:[#allocation2 + $0x10] sm:$0xf]
    %v90 = vld [vmem:[#allocation2 + $0x14] sm:$0xf]
    %v91 = vld [vmem:[#allocation2 + $0x18] sm:$0xf]
    %v92 = vld [vmem:[#allocation2 + $0x1c] sm:$0xf]
    %v93 = vld [vmem:[#allocation2 + $0x20] sm:$0xf]
    %v94 = vld [vmem:[#allocation2 + $0x24] sm:$0xf]
    %v95 = vld [vmem:[#allocation2 + $0x28] sm:$0xf]
    %v96 = vld [vmem:[#allocation2 + $0x2c] sm:$0xf]
    %v97 = vld [vmem:[#allocation2 + $0x30] sm:$0xf]
    %v98 = vld [vmem:[#allocation2 + $0x34] sm:$0xf]
    %v99 = vld [vmem:[#allocation2 + $0x38] sm:$0xf]
    %v100 = vld [vmem:[#allocation2 + $0x3c] sm:$0xf]
    %v101 = vld [vmem:[#allocation2 + $0x40] sm:$0xf]
    %v102 = vld [vmem:[#allocation2 + $0x44] sm:$0xf]
    %v103 = vld [vmem:[#allocation2 + $0x48] sm:$0xf]
    %v104 = vld [vmem:[#allocation2 + $0x4c] sm:$0xf]
    %v105 = vld [vmem:[#allocation2 + $0x50] sm:$0xf]
    %v106 = vld [vmem:[#allocation2 + $0x54] sm:$0xf]
    %v107 = vld [vmem:[#allocation2 + $0x58] sm:$0xf]
    %v108 = vld [vmem:[#allocation2 + $0x5c] sm:$0xf]
    %v109 = vld [vmem:[#allocation2 + $0x60] sm:$0xf]
    %v110 = vld [vmem:[#allocation2 + $0x64] sm:$0xf]
    %v111 = vld [vmem:[#allocation2 + $0x68] sm:$0xf]
    %v112 = vld [vmem:[#allocation2 + $0x6c] sm:$0xf]
    %v113 = vld [vmem:[#allocation2 + $0x70] sm:$0xf]
    %v114 = vld [vmem:[#allocation2 + $0x74] sm:$0xf]
    %v115 = vld [vmem:[#allocation2 + $0x78] sm:$0xf]
    %v116 = vld [vmem:[#allocation2 + $0x7c] sm:$0xf]
    %v117 = vld [vmem:[#allocation2 + $0x80] sm:$0xf]
    %v118 = vld [vmem:[#allocation2 + $0x84] sm:$0xf]
    %v119 = vld [vmem:[#allocation2 + $0x88] sm:$0xf]
    %v120 = vld [vmem:[#allocation2 + $0x8c] sm:$0xf]
    %v121 = vld [vmem:[#allocation2 + $0x90] sm:$0xf]
    %v122 = vld [vmem:[#allocation2 + $0x94] sm:$0xf]
    %v123 = vld [vmem:[#allocation2 + $0x98] sm:$0xf]
    %v124 = vld [vmem:[#allocation2 + $0x9c] sm:$0xf]
    %v125 = vld [vmem:[#allocation2 + $0xa0] sm:$0xf]
    %v126 = vld [vmem:[#allocation2 + $0xa4] sm:$0xf]
    %v127 = vld [vmem:[#allocation2 + $0xa8] sm:$0xf]
    %v128 = vld [vmem:[#allocation2 + $0xac] sm:$0xf]
    %v129 = vld [vmem:[#allocation2 + $0xb0] sm:$0xf]
    %v130 = vld [vmem:[#allocation2 + $0xb4] sm:$0xf]
    %v131 = vld [vmem:[#allocation2 + $0xb8] sm:$0xf]
    %v132 = vld [vmem:[#allocation2 + $0xbc] sm:$0xf]
    %v133 = vld [vmem:[#allocation2 + $0xc0] sm:$0xf]
    %v134 = vld [vmem:[#allocation2 + $0xc4] sm:$0xf]
    %v135 = vld [vmem:[#allocation2 + $0xc8] sm:$0xf]
    %v136 = vld [vmem:[#allocation2 + $0xcc] sm:$0xf]
    %v137 = vld [vmem:[#allocation2 + $0xd0] sm:$0xf]
    %v138 = vld [vmem:[#allocation2 + $0xd4] sm:$0xf]
    %v139 = vld [vmem:[#allocation2 + $0xd8] sm:$0xf]
    %v140 = vld [vmem:[#allocation2 + $0xdc] sm:$0xf]
    %v141 = vld [vmem:[#allocation2 + $0xe0] sm:$0xf]
    %v142 = vld [vmem:[#allocation2 + $0xe4] sm:$0xf]
    %v143 = vld [vmem:[#allocation2 + $0xe8] sm:$0xf]
    %v144 = vld [vmem:[#allocation2 + $0xec] sm:$0xf]
    %v145 = vld [vmem:[#allocation2 + $0xf0] sm:$0xf]
    %v146 = vld [vmem:[#allocation2 + $0xf4] sm:$0xf]
    %v147 = vld [vmem:[#allocation2 + $0xf8] sm:$0xf]
    %v148 = vld [vmem:[#allocation2 + $0xfc] sm:$0xf]
    %v149 = vld [vmem:[#allocation5] sm:$0xf]
    %v150 = vld [vmem:[#allocation5 + $0x4] sm:$0xf]
    %v151 = vld [vmem:[#allocation5 + $0x8] sm:$0xf]
    %v152 = vld [vmem:[#allocation5 + $0xc] sm:$0xf]
    %v153 = vld [vmem:[#allocation5 + $0x10] sm:$0xf]
    %v154 = vld [vmem:[#allocation5 + $0x14] sm:$0xf]
    %v155 = vld [vmem:[#allocation5 + $0x18] sm:$0xf]
    %v156 = vld [vmem:[#allocation5 + $0x1c] sm:$0xf]
    %v157 = vld [vmem:[#allocation5 + $0x20] sm:$0xf]
    %v158 = vld [vmem:[#allocation5 + $0x24] sm:$0xf]
    %v159 = vld [vmem:[#allocation5 + $0x28] sm:$0xf]
    %v160 = vld [vmem:[#allocation5 + $0x2c] sm:$0xf]
    %v161 = vld [vmem:[#allocation5 + $0x30] sm:$0xf]
    %v162 = vld [vmem:[#allocation5 + $0x34] sm:$0xf]
    %v163 = vld [vmem:[#allocation5 + $0x38] sm:$0xf]
    %v164 = vld [vmem:[#allocation5 + $0x3c] sm:$0xf]
    %v165 = vld [vmem:[%s2] sm:$0x1]
    %v167 = vperm.slane %v165, 0
    %v233 = vunpack.c.l.b16 %v85
    %v234 = vunpack.c.l.b16 %v86
    %v235 = vunpack.c.l.b16 %v87
    %v236 = vunpack.c.l.b16 %v88
    %v237 = vunpack.c.l.b16 %v89
    %v238 = vunpack.c.l.b16 %v90
    %v239 = vunpack.c.l.b16 %v91
    %v240 = vunpack.c.l.b16 %v92
    %v241 = vunpack.c.l.b16 %v93
    %v242 = vunpack.c.l.b16 %v94
    %v243 = vunpack.c.l.b16 %v95
    %v244 = vunpack.c.l.b16 %v96
    %v245 = vunpack.c.l.b16 %v97
    %v246 = vunpack.c.l.b16 %v98
    %v247 = vunpack.c.l.b16 %v99
    %v248 = vunpack.c.l.b16 %v100
    %v249 = vunpack.c.l.b16 %v101
    %v250 = vunpack.c.l.b16 %v102
    %v251 = vunpack.c.l.b16 %v103
    %v252 = vunpack.c.l.b16 %v104
    %v253 = vunpack.c.l.b16 %v105
    %v254 = vunpack.c.l.b16 %v106
    %v255 = vunpack.c.l.b16 %v107
    %v256 = vunpack.c.l.b16 %v108
    %v257 = vunpack.c.l.b16 %v109
    %v258 = vunpack.c.l.b16 %v110
    %v259 = vunpack.c.l.b16 %v111
    %v260 = vunpack.c.l.b16 %v112
    %v261 = vunpack.c.l.b16 %v113
    %v262 = vunpack.c.l.b16 %v114
    %v263 = vunpack.c.l.b16 %v115
    %v264 = vunpack.c.l.b16 %v116
    %v265 = vunpack.c.l.b16 %v117
    %v266 = vunpack.c.l.b16 %v118
    %v267 = vunpack.c.l.b16 %v119
    %v268 = vunpack.c.l.b16 %v120
    %v269 = vunpack.c.l.b16 %v121
    %v270 = vunpack.c.l.b16 %v122
    %v271 = vunpack.c.l.b16 %v123
    %v272 = vunpack.c.l.b16 %v124
    %v273 = vunpack.c.l.b16 %v125
    %v274 = vunpack.c.l.b16 %v126
    %v275 = vunpack.c.l.b16 %v127
    %v276 = vunpack.c.l.b16 %v128
    %v277 = vunpack.c.l.b16 %v129
    %v278 = vunpack.c.l.b16 %v130
    %v279 = vunpack.c.l.b16 %v131
    %v280 = vunpack.c.l.b16 %v132
    %v281 = vunpack.c.l.b16 %v133
    %v282 = vunpack.c.l.b16 %v134
    %v283 = vunpack.c.l.b16 %v135
    %v284 = vunpack.c.l.b16 %v136
    %v285 = vunpack.c.l.b16 %v137
    %v286 = vunpack.c.l.b16 %v138
    %v287 = vunpack.c.l.b16 %v139
    %v288 = vunpack.c.l.b16 %v140
    %v289 = vunpack.c.l.b16 %v141
    %v290 = vunpack.c.l.b16 %v142
    %v291 = vunpack.c.l.b16 %v143
    %v292 = vunpack.c.l.b16 %v144
    %v293 = vunpack.c.l.b16 %v145
    %v294 = vunpack.c.l.b16 %v146
    %v295 = vunpack.c.l.b16 %v147
    %v296 = vunpack.c.l.b16 %v148
    %v297 = vpack.c.b16 %v234, %v233
    %v298 = vpack.c.b16 %v236, %v235
    %v299 = vpack.c.b16 %v238, %v237
    %v300 = vpack.c.b16 %v240, %v239
    %v301 = vpack.c.b16 %v242, %v241
    %v302 = vpack.c.b16 %v244, %v243
    %v303 = vpack.c.b16 %v246, %v245
    %v304 = vpack.c.b16 %v248, %v247
    %v305 = vpack.c.b16 %v250, %v249
    %v306 = vpack.c.b16 %v252, %v251
    %v307 = vpack.c.b16 %v254, %v253
    %v308 = vpack.c.b16 %v256, %v255
    %v309 = vpack.c.b16 %v258, %v257
    %v310 = vpack.c.b16 %v260, %v259
    %v311 = vpack.c.b16 %v262, %v261
    %v312 = vpack.c.b16 %v264, %v263
    %v313 = vpack.c.b16 %v266, %v265
    %v314 = vpack.c.b16 %v268, %v267
    %v315 = vpack.c.b16 %v270, %v269
    %v316 = vpack.c.b16 %v272, %v271
    %v317 = vpack.c.b16 %v274, %v273
    %v318 = vpack.c.b16 %v276, %v275
    %v319 = vpack.c.b16 %v278, %v277
    %v320 = vpack.c.b16 %v280, %v279
    %v321 = vpack.c.b16 %v282, %v281
    %v322 = vpack.c.b16 %v284, %v283
    %v323 = vpack.c.b16 %v286, %v285
    %v324 = vpack.c.b16 %v288, %v287
    %v325 = vpack.c.b16 %v290, %v289
    %v326 = vpack.c.b16 %v292, %v291
    %v327 = vpack.c.b16 %v294, %v293
    %v328 = vpack.c.b16 %v296, %v295
    %v377 = vunpack.c.l.b16 %v149
    %v378 = vunpack.c.l.b16 %v150
    %v379 = vunpack.c.l.b16 %v151
    %v380 = vunpack.c.l.b16 %v152
    %v381 = vunpack.c.l.b16 %v153
    %v382 = vunpack.c.l.b16 %v154
    %v383 = vunpack.c.l.b16 %v155
    %v384 = vunpack.c.l.b16 %v156
    %v385 = vunpack.c.l.b16 %v157
    %v386 = vunpack.c.l.b16 %v158
    %v387 = vunpack.c.l.b16 %v159
    %v388 = vunpack.c.l.b16 %v160
    %v389 = vunpack.c.l.b16 %v161
    %v390 = vunpack.c.l.b16 %v162
    %v391 = vunpack.c.l.b16 %v163
    %v392 = vunpack.c.l.b16 %v164
    %v393 = vpack.c.b16 %v378, %v377
    %v394 = vpack.c.b16 %v380, %v379
    %v395 = vpack.c.b16 %v382, %v381
    %v396 = vpack.c.b16 %v384, %v383
    %v397 = vpack.c.b16 %v386, %v385
    %v398 = vpack.c.b16 %v388, %v387
    %v399 = vpack.c.b16 %v390, %v389
    %v400 = vpack.c.b16 %v392, %v391
    %409 = vmatpush.bf16.msra.mxu0 %v400
    %410 = vmatpush.bf16.msra.mxu0 %v399
    %411 = vmatpush.bf16.msra.mxu0 %v398
    %412 = vmatpush.bf16.msra.mxu0 %v397
    %413 = vmatpush.bf16.msra.mxu0 %v396
    %414 = vmatpush.bf16.msra.mxu0 %v395
    %415 = vmatpush.bf16.msra.mxu0 %v394
    %416 = vmatpush.bf16.msra.mxu0 %v393
    %417 = vmatmul.bf16.gmra.mxu0 %v297
    %v418 = vpop.f32.mrf.mxu0
    %v419 = vadd.f32 %v167, %v418
    %v420 = vpop.f32.mrf.mxu0
    %v421 = vadd.f32 %v167, %v420
    %422 = vmatmul.bf16.gmra.mxu0 %v298
    %v423 = vpop.f32.mrf.mxu0
    %v424 = vadd.f32 %v167, %v423
    %v425 = vpop.f32.mrf.mxu0
    %v426 = vadd.f32 %v167, %v425
    %427 = vmatmul.bf16.gmra.mxu0 %v299
    %v428 = vpop.f32.mrf.mxu0
    %v429 = vadd.f32 %v167, %v428
    %v430 = vpop.f32.mrf.mxu0
    %v431 = vadd.f32 %v167, %v430
    %432 = vmatmul.bf16.gmra.mxu0 %v300
    %v433 = vpop.f32.mrf.mxu0
    %v434 = vadd.f32 %v167, %v433
    %v435 = vpop.f32.mrf.mxu0
    %v436 = vadd.f32 %v167, %v435
    %437 = vmatmul.bf16.gmra.mxu0 %v301
    %v438 = vpop.f32.mrf.mxu0
    %v439 = vadd.f32 %v167, %v438
    %v440 = vpop.f32.mrf.mxu0
    %v441 = vadd.f32 %v167, %v440
    %442 = vmatmul.bf16.gmra.mxu0 %v302
    %v443 = vpop.f32.mrf.mxu0
    %v444 = vadd.f32 %v167, %v443
    %v445 = vpop.f32.mrf.mxu0
    %v446 = vadd.f32 %v167, %v445
    %447 = vmatmul.bf16.gmra.mxu0 %v303
    %v448 = vpop.f32.mrf.mxu0
    %v449 = vadd.f32 %v167, %v448
    %v450 = vpop.f32.mrf.mxu0
    %v451 = vadd.f32 %v167, %v450
    %452 = vmatmul.bf16.gmra.mxu0 %v304
    %v453 = vpop.f32.mrf.mxu0
    %v454 = vadd.f32 %v167, %v453
    %v455 = vpop.f32.mrf.mxu0
    %v456 = vadd.f32 %v167, %v455
    %457 = vmatmul.bf16.gmra.mxu0 %v305
    %v458 = vpop.f32.mrf.mxu0
    %v459 = vadd.f32 %v167, %v458
    %v460 = vpop.f32.mrf.mxu0
    %v461 = vadd.f32 %v167, %v460
    %462 = vmatmul.bf16.gmra.mxu0 %v306
    %v463 = vpop.f32.mrf.mxu0
    %v464 = vadd.f32 %v167, %v463
    %v465 = vpop.f32.mrf.mxu0
    %v466 = vadd.f32 %v167, %v465
    %467 = vmatmul.bf16.gmra.mxu0 %v307
    %v468 = vpop.f32.mrf.mxu0
    %v469 = vadd.f32 %v167, %v468
    %v470 = vpop.f32.mrf.mxu0
    %v471 = vadd.f32 %v167, %v470
    %472 = vmatmul.bf16.gmra.mxu0 %v308
    %v473 = vpop.f32.mrf.mxu0
    %v474 = vadd.f32 %v167, %v473
    %v475 = vpop.f32.mrf.mxu0
    %v476 = vadd.f32 %v167, %v475
    %477 = vmatmul.bf16.gmra.mxu0 %v309
    %v478 = vpop.f32.mrf.mxu0
    %v479 = vadd.f32 %v167, %v478
    %v480 = vpop.f32.mrf.mxu0
    %v481 = vadd.f32 %v167, %v480
    %482 = vmatmul.bf16.gmra.mxu0 %v310
    %v483 = vpop.f32.mrf.mxu0
    %v484 = vadd.f32 %v167, %v483
    %v485 = vpop.f32.mrf.mxu0
    %v486 = vadd.f32 %v167, %v485
    %487 = vmatmul.bf16.gmra.mxu0 %v311
    %v488 = vpop.f32.mrf.mxu0
    %v489 = vadd.f32 %v167, %v488
    %v490 = vpop.f32.mrf.mxu0
    %v491 = vadd.f32 %v167, %v490
    %492 = vmatmul.bf16.gmra.mxu0 %v312
    %v493 = vpop.f32.mrf.mxu0
    %v494 = vadd.f32 %v167, %v493
    %v495 = vpop.f32.mrf.mxu0
    %v496 = vadd.f32 %v167, %v495
    %497 = vmatmul.bf16.gmra.mxu0 %v313
    %v498 = vpop.f32.mrf.mxu0
    %v499 = vadd.f32 %v167, %v498
    %v500 = vpop.f32.mrf.mxu0
    %v501 = vadd.f32 %v167, %v500
    %502 = vmatmul.bf16.gmra.mxu0 %v314
    %v503 = vpop.f32.mrf.mxu0
    %v504 = vadd.f32 %v167, %v503
    %v505 = vpop.f32.mrf.mxu0
    %v506 = vadd.f32 %v167, %v505
    %507 = vmatmul.bf16.gmra.mxu0 %v315
    %v508 = vpop.f32.mrf.mxu0
    %v509 = vadd.f32 %v167, %v508
    %v510 = vpop.f32.mrf.mxu0
    %v511 = vadd.f32 %v167, %v510
    %512 = vmatmul.bf16.gmra.mxu0 %v316
    %v513 = vpop.f32.mrf.mxu0
    %v514 = vadd.f32 %v167, %v513
    %v515 = vpop.f32.mrf.mxu0
    %v516 = vadd.f32 %v167, %v515
    %517 = vmatmul.bf16.gmra.mxu0 %v317
    %v518 = vpop.f32.mrf.mxu0
    %v519 = vadd.f32 %v167, %v518
    %v520 = vpop.f32.mrf.mxu0
    %v521 = vadd.f32 %v167, %v520
    %522 = vmatmul.bf16.gmra.mxu0 %v318
    %v523 = vpop.f32.mrf.mxu0
    %v524 = vadd.f32 %v167, %v523
    %v525 = vpop.f32.mrf.mxu0
    %v526 = vadd.f32 %v167, %v525
    %527 = vmatmul.bf16.gmra.mxu0 %v319
    %v528 = vpop.f32.mrf.mxu0
    %v529 = vadd.f32 %v167, %v528
    %v530 = vpop.f32.mrf.mxu0
    %v531 = vadd.f32 %v167, %v530
    %532 = vmatmul.bf16.gmra.mxu0 %v320
    %v533 = vpop.f32.mrf.mxu0
    %v534 = vadd.f32 %v167, %v533
    %v535 = vpop.f32.mrf.mxu0
    %v536 = vadd.f32 %v167, %v535
    %537 = vmatmul.bf16.gmra.mxu0 %v321
    %v538 = vpop.f32.mrf.mxu0
    %v539 = vadd.f32 %v167, %v538
    %v540 = vpop.f32.mrf.mxu0
    %v541 = vadd.f32 %v167, %v540
    %542 = vmatmul.bf16.gmra.mxu0 %v322
    %v543 = vpop.f32.mrf.mxu0
    %v544 = vadd.f32 %v167, %v543
    %v545 = vpop.f32.mrf.mxu0
    %v546 = vadd.f32 %v167, %v545
    %547 = vmatmul.bf16.gmra.mxu0 %v323
    %v548 = vpop.f32.mrf.mxu0
    %v549 = vadd.f32 %v167, %v548
    %v550 = vpop.f32.mrf.mxu0
    %v551 = vadd.f32 %v167, %v550
    %552 = vmatmul.bf16.gmra.mxu0 %v324
    %v553 = vpop.f32.mrf.mxu0
    %v554 = vadd.f32 %v167, %v553
    %v555 = vpop.f32.mrf.mxu0
    %v556 = vadd.f32 %v167, %v555
    %557 = vmatmul.bf16.gmra.mxu0 %v325
    %v558 = vpop.f32.mrf.mxu0
    %v559 = vadd.f32 %v167, %v558
    %v560 = vpop.f32.mrf.mxu0
    %v561 = vadd.f32 %v167, %v560
    %562 = vmatmul.bf16.gmra.mxu0 %v326
    %v563 = vpop.f32.mrf.mxu0
    %v564 = vadd.f32 %v167, %v563
    %v565 = vpop.f32.mrf.mxu0
    %v566 = vadd.f32 %v167, %v565
    %567 = vmatmul.bf16.gmra.mxu0 %v327
    %v568 = vpop.f32.mrf.mxu0
    %v569 = vadd.f32 %v167, %v568
    %v570 = vpop.f32.mrf.mxu0
    %v571 = vadd.f32 %v167, %v570
    %572 = vmatmul.bf16.gmra.mxu0 %v328
    %v573 = vpop.f32.mrf.mxu0
    %v574 = vadd.f32 %v167, %v573
    %v575 = vpop.f32.mrf.mxu0
    %v576 = vadd.f32 %v167, %v575
    %577 = vdwg.mxu0
    %v578 = vmax.f32 %v419, 0.0
    %v579 = vmax.f32 %v421, 0.0
    %v580 = vmax.f32 %v424, 0.0
    %v581 = vmax.f32 %v426, 0.0
    %v582 = vmax.f32 %v429, 0.0
    %v583 = vmax.f32 %v431, 0.0
    %v584 = vmax.f32 %v434, 0.0
    %v585 = vmax.f32 %v436, 0.0
    %v586 = vmax.f32 %v439, 0.0
    %v587 = vmax.f32 %v441, 0.0
    %v588 = vmax.f32 %v444, 0.0
    %v589 = vmax.f32 %v446, 0.0
    %v590 = vmax.f32 %v449, 0.0
    %v591 = vmax.f32 %v451, 0.0
    %v592 = vmax.f32 %v454, 0.0
    %v593 = vmax.f32 %v456, 0.0
    %v594 = vmax.f32 %v459, 0.0
    %v595 = vmax.f32 %v461, 0.0
    %v596 = vmax.f32 %v464, 0.0
    %v597 = vmax.f32 %v466, 0.0
    %v598 = vmax.f32 %v469, 0.0
    %v599 = vmax.f32 %v471, 0.0
    %v600 = vmax.f32 %v474, 0.0
    %v601 = vmax.f32 %v476, 0.0
    %v602 = vmax.f32 %v479, 0.0
    %v603 = vmax.f32 %v481, 0.0
    %v604 = vmax.f32 %v484, 0.0
    %v605 = vmax.f32 %v486, 0.0
    %v606 = vmax.f32 %v489, 0.0
    %v607 = vmax.f32 %v491, 0.0
    %v608 = vmax.f32 %v494, 0.0
    %v609 = vmax.f32 %v496, 0.0
    %v610 = vmax.f32 %v499, 0.0
    %v611 = vmax.f32 %v501, 0.0
    %v612 = vmax.f32 %v504, 0.0
    %v613 = vmax.f32 %v506, 0.0
    %v614 = vmax.f32 %v509, 0.0
    %v615 = vmax.f32 %v511, 0.0
    %v616 = vmax.f32 %v514, 0.0
    %v617 = vmax.f32 %v516, 0.0
    %v618 = vmax.f32 %v519, 0.0
    %v619 = vmax.f32 %v521, 0.0
    %v620 = vmax.f32 %v524, 0.0
    %v621 = vmax.f32 %v526, 0.0
    %v622 = vmax.f32 %v529, 0.0
    %v623 = vmax.f32 %v531, 0.0
    %v624 = vmax.f32 %v534, 0.0
    %v625 = vmax.f32 %v536, 0.0
    %v626 = vmax.f32 %v539, 0.0
    %v627 = vmax.f32 %v541, 0.0
    %v628 = vmax.f32 %v544, 0.0
    %v629 = vmax.f32 %v546, 0.0
    %v630 = vmax.f32 %v549, 0.0
    %v631 = vmax.f32 %v551, 0.0
    %v632 = vmax.f32 %v554, 0.0
    %v633 = vmax.f32 %v556, 0.0
    %v634 = vmax.f32 %v559, 0.0
    %v635 = vmax.f32 %v561, 0.0
    %v636 = vmax.f32 %v564, 0.0
    %v637 = vmax.f32 %v566, 0.0
    %v638 = vmax.f32 %v569, 0.0
    %v639 = vmax.f32 %v571, 0.0
    %v640 = vmax.f32 %v574, 0.0
    %v641 = vmax.f32 %v576, 0.0
    %v642 = vld [vmem:[#allocation7] sm:$0xff]
    %644 = vst [vmem:[#allocation1] ss:$4 sm:$0xff] %v642
    %v645 = vld.sshfl [vmem:[#allocation1] sm:$0xff pattern:$0x73625140]
    %v646 = vld.sshfl [vmem:[#allocation1 + $0x8] sm:$0xff pattern:$0x73625140]
    %v647 = vld.sshfl [vmem:[#allocation1 + $0x10] sm:$0xff pattern:$0x73625140]
    %v648 = vld.sshfl [vmem:[#allocation1 + $0x18] sm:$0xff pattern:$0x73625140]
    %653 = vmatpush.msra.mxu0 %v593
    %654 = vmatpush.msra.mxu0 %v592
    %655 = vmatpush.msra.mxu0 %v591
    %656 = vmatpush.msra.mxu0 %v590
    %657 = vmatpush.msra.mxu0 %v589
    %658 = vmatpush.msra.mxu0 %v588
    %659 = vmatpush.msra.mxu0 %v587
    %660 = vmatpush.msra.mxu0 %v586
    %661 = vmatpush.msra.mxu0 %v585
    %662 = vmatpush.msra.mxu0 %v584
    %663 = vmatpush.msra.mxu0 %v583
    %664 = vmatpush.msra.mxu0 %v582
    %665 = vmatpush.msra.mxu0 %v581
    %666 = vmatpush.msra.mxu0 %v580
    %667 = vmatpush.msra.mxu0 %v579
    %668 = vmatpush.msra.mxu0 %v578
    %669 = vmatmul.f32.gmra.mxu0 %v645
    %v670 = vpop.f32.mrf.mxu0
    %v671 = vadd.f32 0.0, %v670
    %672 = vdwg.mxu0
    %673 = vmatpush.msra.mxu0 %v609
    %674 = vmatpush.msra.mxu0 %v608
    %675 = vmatpush.msra.mxu0 %v607
    %676 = vmatpush.msra.mxu0 %v606
    %677 = vmatpush.msra.mxu0 %v605
    %678 = vmatpush.msra.mxu0 %v604
    %679 = vmatpush.msra.mxu0 %v603
    %680 = vmatpush.msra.mxu0 %v602
    %681 = vmatpush.msra.mxu0 %v601
    %682 = vmatpush.msra.mxu0 %v600
    %683 = vmatpush.msra.mxu0 %v599
    %684 = vmatpush.msra.mxu0 %v598
    %685 = vmatpush.msra.mxu0 %v597
    %686 = vmatpush.msra.mxu0 %v596
    %687 = vmatpush.msra.mxu0 %v595
    %688 = vmatpush.msra.mxu0 %v594
    %689 = vmatmul.f32.gmra.mxu0 %v646
    %v690 = vpop.f32.mrf.mxu0
    %v691 = vadd.f32 %v671, %v690
    %692 = vdwg.mxu0
    %693 = vmatpush.msra.mxu0 %v625
    %694 = vmatpush.msra.mxu0 %v624
    %695 = vmatpush.msra.mxu0 %v623
    %696 = vmatpush.msra.mxu0 %v622
    %697 = vmatpush.msra.mxu0 %v621
    %698 = vmatpush.msra.mxu0 %v620
    %699 = vmatpush.msra.mxu0 %v619
    %700 = vmatpush.msra.mxu0 %v618
    %701 = vmatpush.msra.mxu0 %v617
    %702 = vmatpush.msra.mxu0 %v616
    %703 = vmatpush.msra.mxu0 %v615
    %704 = vmatpush.msra.mxu0 %v614
    %705 = vmatpush.msra.mxu0 %v613
    %706 = vmatpush.msra.mxu0 %v612
    %707 = vmatpush.msra.mxu0 %v611
    %708 = vmatpush.msra.mxu0 %v610
    %709 = vmatmul.f32.gmra.mxu0 %v647
    %v710 = vpop.f32.mrf.mxu0
    %v711 = vadd.f32 %v691, %v710
    %712 = vdwg.mxu0
    %713 = vmatpush.msra.mxu0 %v641
    %714 = vmatpush.msra.mxu0 %v640
    %715 = vmatpush.msra.mxu0 %v639
    %716 = vmatpush.msra.mxu0 %v638
    %717 = vmatpush.msra.mxu0 %v637
    %718 = vmatpush.msra.mxu0 %v636
    %719 = vmatpush.msra.mxu0 %v635
    %720 = vmatpush.msra.mxu0 %v634
    %721 = vmatpush.msra.mxu0 %v633
    %722 = vmatpush.msra.mxu0 %v632
    %723 = vmatpush.msra.mxu0 %v631
    %724 = vmatpush.msra.mxu0 %v630
    %725 = vmatpush.msra.mxu0 %v629
    %726 = vmatpush.msra.mxu0 %v628
    %727 = vmatpush.msra.mxu0 %v627
    %728 = vmatpush.msra.mxu0 %v626
    %729 = vmatmul.f32.gmra.mxu0 %v648
    %v730 = vpop.f32.mrf.mxu0
    %v731 = vadd.f32 %v711, %v730
    %732 = vdwg.mxu0
    %v733 = vld [vmem:[#allocation8] sm:$0xff]
    %v734 = vld [vmem:[#allocation8 + $0x8] sm:$0xff]
    %v735 = vld [vmem:[#allocation8 + $0x10] sm:$0xff]
    %v736 = vld [vmem:[#allocation8 + $0x18] sm:$0xff]
    %v737 = vld [vmem:[#allocation8 + $0x20] sm:$0xff]
    %v738 = vld [vmem:[#allocation8 + $0x28] sm:$0xff]
    %v739 = vld [vmem:[#allocation8 + $0x30] sm:$0xff]
    %v740 = vld [vmem:[#allocation8 + $0x38] sm:$0xff]
    %v741 = vld [vmem:[#allocation8 + $0x40] sm:$0xff]
    %v742 = vld [vmem:[#allocation8 + $0x48] sm:$0xff]
    %v743 = vld [vmem:[#allocation8 + $0x50] sm:$0xff]
    %v744 = vld [vmem:[#allocation8 + $0x58] sm:$0xff]
    %v745 = vld [vmem:[#allocation8 + $0x60] sm:$0xff]
    %v746 = vld [vmem:[#allocation8 + $0x68] sm:$0xff]
    %v747 = vld [vmem:[#allocation8 + $0x70] sm:$0xff]
    %v748 = vld [vmem:[#allocation8 + $0x78] sm:$0xff]
    %v749 = vld [vmem:[%s5] sm:$0x1]
    %v751 = vperm.slane %v749, 0
    %753 = vmatpush.msra.mxu0 %v748
    %754 = vmatpush.msra.mxu0 %v747
    %755 = vmatpush.msra.mxu0 %v746
    %756 = vmatpush.msra.mxu0 %v745
    %757 = vmatpush.msra.mxu0 %v744
    %758 = vmatpush.msra.mxu0 %v743
    %759 = vmatpush.msra.mxu0 %v742
    %760 = vmatpush.msra.mxu0 %v741
    %761 = vmatpush.msra.mxu0 %v740
    %762 = vmatpush.msra.mxu0 %v739
    %763 = vmatpush.msra.mxu0 %v738
    %764 = vmatpush.msra.mxu0 %v737
    %765 = vmatpush.msra.mxu0 %v736
    %766 = vmatpush.msra.mxu0 %v735
    %767 = vmatpush.msra.mxu0 %v734
    %768 = vmatpush.msra.mxu0 %v733
    %769 = vmatmul.f32.gmra.mxu0 %v731
    %v770 = vpop.f32.mrf.mxu0
    %v771 = vadd.f32 %v751, %v770
    %772 = vdwg.mxu0
    %773 = vst [vmem:[#allocation10] sm:$0x3] %v771
    // Predicated region
    $region42: #{tpu_custom_call.1} parent=1 // pred_check
      _
    $region43: #{tpu_custom_call.1} parent=1 // pred_check_branch
      %775 = sbr.rel (0) target = $region45
    $region44: #{tpu_custom_call.1} parent=1 // pred_region
      %777 = vsyncadd [#allocation4], 0
      %s779 = sshll.u32 [#allocation10], 4
      %s780 = int_to_ptr.vmem [resolvable:$true] %s779
      %s781 = sshll.u32 %s6, 4
      %s782 = int_to_ptr.hbm [resolvable:$true] %s781
      %784 = dma.vmem_to_hbm [thread:$0]  %s780, 32, %s782, [#allocation4]
    $region45: #{tpu_custom_call.1} parent=1 // pred_fallthru
      _
    // Predicated region
    $region46: #{tpu_custom_call.1} parent=1 // pred_check
      _
    $region47: #{tpu_custom_call.1} parent=1 // pred_check_branch
      %786 = sbr.rel (0) target = $region49
    $region48: #{tpu_custom_call.1} parent=1 // pred_region
      %788 = dma.done [#allocation4], 32
    $region49: #{tpu_custom_call.1} parent=1 // pred_fallthru
      _
    %789 = vsyncpa [#allocation3], 1
    %790 = vsyncpa [#allocation6], 1
    %791 = vsyncpa [#allocation9], 1
    %792 = vsyncpa [#allocation4], 1

</llo_original>
